<compile_context>
chip_gen: v7x
topology: tpu7x:2x2x1
jax: 0.10.0
libtpu: 0.0.40
codegen_flags: <defaults>
</compile_context>

<pallas_src>
import functools
import math

import jax
import jax.numpy as jnp
from jax.experimental import pallas as pl
from jax.experimental.pallas import tpu as pltpu


def rnn_fc_kernel(x_ref, wih0T_ref, wcomb_ref, b_ref, wfc_ref, bfc_ref,
                  out_ref, proj_ref, *, hidden_size, num_layers, seq_len,
                  batch):
    """Wavefront-fused multi-layer tanh RNN + final Linear, all VMEM-resident.

    x_ref     : (T*B, C)    bf16  time-major input; timestep t = rows [t*B, t*B+B)
    wih0T_ref : (C, L*H)    bf16  layer-0 W_ih^T, zero-padded to L*H lanes
    wcomb_ref : (L*H, L*H)  bf16  combined transition: block(l,l) = W_hh_l^T,
                                   block(l-1,l) = W_ih_l^T for l >= 1
    b_ref     : (1, L*H)    f32   [b_ih0+b_hh0 | ... | b_ih_{L-1}+b_hh_{L-1}]
    wfc_ref   : (O, L*H)    f32   fc weight, zero-padded (only last layer's cols)
    bfc_ref   : (1, O)      f32   fc bias
    out_ref   : (B, O)      f32
    proj_ref  : (T*B, L*H)  f32   scratch: hoisted layer-0 projection + biases
    """
    H, L, T, B = hidden_size, num_layers, seq_len, batch
    LH = L * H

    # Hoisted layer-0 input projection for ALL timesteps: one big MXU matmul,
    # off the recurrent critical path.  Because wih0T is zero-padded, columns
    # [H:] of proj hold exactly the per-layer biases of layers 1..L-1, so each
    # proj row block is the full per-wavefront-step injection.
    proj_ref[...] = (
        jnp.dot(x_ref[...], wih0T_ref[...], preferred_element_type=jnp.float32)
        + b_ref[...])

    # Hoisted lane-index iota; only used for head-step masking.
    lane = jax.lax.broadcasted_iota(jnp.int32, (B, LH), 1)

    # Wavefront recurrence: after step s, state[:, l*H:(l+1)*H] == h_l[s - l].
    # One fused (B, L*H) x (L*H, L*H) matmul + one tanh per step; no VMEM
    # stores inside the loop.
    state = jnp.zeros((B, LH), jnp.float32)
    for s in range(T + L - 1):          # static full unroll (T+L-1 is small)
        # Layer-0 injection row block.  In the tail (s >= T) layer 0 is done
        # and its columns are never read again, so a stale (clamped) row is
        # harmless; the bias columns [H:] stay valid, which is what matters.
        t0 = min(s, T - 1)
        inj = proj_ref[pl.ds(t0 * B, B), :]
        upd = jnp.tanh(
            inj + jnp.dot(state.astype(jnp.bfloat16), wcomb_ref[...],
                          preferred_element_type=jnp.float32))
        if s < L - 1:
            # Head: layers l > s have not started yet; keep their columns at
            # the zero initial hidden state.
            upd = jnp.where(lane < (s + 1) * H, upd, 0.0)
        state = upd

    # Final Linear on the last layer's hidden state at the last timestep.
    # wfc is zero-padded over all L*H lanes, so no lane-slice of `state` is
    # needed; for output_size == 1 use a VPU multiply + XLU lane reduce instead
    # of a 1-lane MXU pass.
    if out_ref.shape[1] == 1:
        out_ref[...] = (jnp.sum(state * wfc_ref[...], axis=-1, keepdims=True)
                        + bfc_ref[...])
    else:
        out_ref[...] = (
            jax.lax.dot_general(
                state.astype(jnp.bfloat16), wfc_ref[...].astype(jnp.bfloat16),
                dimension_numbers=(((1,), (1,)), ((), ())),
                preferred_element_type=jnp.float32)
            + bfc_ref[...])


def rnn_model_forward(x, params, hidden_size, num_layers):
    """Equivalent of RNNModel.forward(x): squeeze(fc(rnn(x)[:, -1, :]))."""
    B, T, C = x.shape
    H, L = hidden_size, num_layers
    O = params["wfc"].shape[0]
    LH = L * H

    # Pad batch to a full sublane group so per-timestep (B, L*H) row blocks are
    # sublane-aligned; padded rows see zero input and are discarded after the
    # call (never reduced over).
    B_pad = max(8, ((B + 7) // 8) * 8)
    x_p = jnp.zeros((B_pad, T, C), jnp.float32).at[:B].set(x.astype(jnp.float32))
    # Time-major (T*B_pad, C): each timestep is a contiguous, aligned row block.
    x_tm = jnp.transpose(x_p, (1, 0, 2)).reshape(T * B_pad, C).astype(jnp.bfloat16)

    # Layer-0 input weight, transposed and zero-padded to L*H output lanes.
    wih0T = (jnp.zeros((C, LH), jnp.float32)
             .at[:, :H].set(params["wih"][0].T)).astype(jnp.bfloat16)

    # Combined wavefront transition matrix (L*H, L*H):
    #   block (l, l)   = W_hh_l^T   (recurrence)
    #   block (l-1, l) = W_ih_l^T   (cross-layer input, l >= 1)
    wcomb = jnp.zeros((LH, LH), jnp.float32)
    for l in range(L):
        wcomb = wcomb.at[l * H:(l + 1) * H, l * H:(l + 1) * H].set(
            params["whh"][l].T)
        if l >= 1:
            wcomb = wcomb.at[(l - 1) * H:l * H, l * H:(l + 1) * H].set(
                params["wih"][l].T)
    wcomb = wcomb.astype(jnp.bfloat16)

    # Per-layer combined biases, concatenated along lanes.
    b = jnp.concatenate(
        [params["bih"][l] + params["bhh"][l] for l in range(L)]
    ).reshape(1, LH).astype(jnp.float32)

    # fc weight, zero-padded so it only picks out the last layer's columns.
    wfc = (jnp.zeros((O, LH), jnp.float32)
           .at[:, (L - 1) * H:].set(params["wfc"])).astype(jnp.float32)
    bfc = params["bfc"].reshape(1, O).astype(jnp.float32)

    # Advisory cost hint for XLA scheduling around the custom call.
    flops = (2 * T * B_pad * C * LH                     # hoisted input proj
             + 2 * (T + L - 1) * B_pad * LH * LH        # wavefront matmuls
             + 2 * B_pad * LH * O)                      # fc
    transcendentals = (T + L - 1) * B_pad * LH          # tanh
    operands = (x_tm, wih0T, wcomb, b, wfc, bfc)
    bytes_accessed = (sum(a.size * a.dtype.itemsize for a in operands)
                      + B_pad * O * 4)

    kernel = functools.partial(rnn_fc_kernel, hidden_size=H, num_layers=L,
                               seq_len=T, batch=B_pad)

    vmem = pl.BlockSpec(memory_space=pltpu.MemorySpace.VMEM)
    out = pl.pallas_call(
        kernel,
        out_shape=jax.ShapeDtypeStruct((B_pad, O), jnp.float32),
        in_specs=[vmem] * 6,
        out_specs=vmem,
        scratch_shapes=[pltpu.VMEM((T * B_pad, LH), jnp.float32)],  # proj
        cost_estimate=pl.CostEstimate(flops=flops,
                                      transcendentals=transcendentals,
                                      bytes_accessed=bytes_accessed),
    )(*operands)

    out = out[:B]                 # drop batch padding
    return jnp.squeeze(out)       # matches torch .squeeze(): (B,) for O == 1


def reference_forward(x, params, hidden_size, num_layers):
    """Pure-JAX f32 reference matching nn.RNN(tanh, batch_first) + Linear + squeeze."""
    B, T, _ = x.shape
    H = hidden_size
    seq = x.astype(jnp.float32)
    for l in range(num_layers):
        h = jnp.zeros((B, H), jnp.float32)
        outs = []
        for t in range(T):
            h = jnp.tanh(seq[:, t, :] @ params["wih"][l].T + params["bih"][l]
                         + h @ params["whh"][l].T + params["bhh"][l])
            outs.append(h)
        seq = jnp.stack(outs, axis=1)
    out = seq[:, -1, :] @ params["wfc"].T + params["bfc"]
    return jnp.squeeze(out)


def init_params(key, input_size, hidden_size, output_size, num_layers):
    """Deterministic init mimicking PyTorch's U(-1/sqrt(H), 1/sqrt(H))."""
    H = hidden_size
    k = 1.0 / math.sqrt(H)
    params = {"wih": [], "whh": [], "bih": [], "bhh": []}
    for l in range(num_layers):
        in_dim = input_size if l == 0 else H
        key, k1, k2, k3, k4 = jax.random.split(key, 5)
        params["wih"].append(jax.random.uniform(k1, (H, in_dim), jnp.float32, -k, k))
        params["whh"].append(jax.random.uniform(k2, (H, H), jnp.float32, -k, k))
        params["bih"].append(jax.random.uniform(k3, (H,), jnp.float32, -k, k))
        params["bhh"].append(jax.random.uniform(k4, (H,), jnp.float32, -k, k))
    key, k1, k2 = jax.random.split(key, 3)
    kf = 1.0 / math.sqrt(H)
    params["wfc"] = jax.random.uniform(k1, (output_size, H), jnp.float32, -kf, kf)
    params["bfc"] = jax.random.uniform(k2, (output_size,), jnp.float32, -kf, kf)
    return params


if __name__ == "__main__":
    # Small shapes consistent with the module: batch=2, seq=8, input_size=4,
    # hidden_size=32, num_layers=3, output_size=1.
    B, T, C = 2, 8, 4
    H, L, O = 32, 3, 1

    root = jax.random.PRNGKey(0)
    kx, kp = jax.random.split(root)
    x = jax.random.normal(kx, (B, T, C), jnp.float32)
    params = init_params(kp, C, H, O, L)

    y = rnn_model_forward(x, params, hidden_size=H, num_layers=L)
    y = jax.block_until_ready(y)

    y_ref = reference_forward(x, params, hidden_size=H, num_layers=L)
    assert y.shape == (B,), y.shape
    # Kernel uses bf16 MXU operands with f32 accumulation -> compare with a
    # bf16-appropriate tolerance against the pure-f32 reference.
    assert jnp.allclose(y, y_ref, atol=2e-2, rtol=2e-2), (y, y_ref)

    print("KERNEL_OK")
</pallas_src>

<mosaic_0001>
module attributes {stable_mosaic.version = 11 : i64} {
  func.func @rnn_fc_kernel(%arg0: memref<64x4xbf16, #tpu.memory_space<vmem>>, %arg1: memref<4x96xbf16, #tpu.memory_space<vmem>>, %arg2: memref<96x96xbf16, #tpu.memory_space<vmem>>, %arg3: memref<1x96xf32, #tpu.memory_space<vmem>>, %arg4: memref<1x96xf32, #tpu.memory_space<vmem>>, %arg5: memref<1x1xf32, #tpu.memory_space<vmem>>, %arg6: memref<8x1xf32, #tpu.memory_space<vmem>>, %arg7: memref<64x96xf32, #tpu.memory_space<vmem>>) attributes {dimension_semantics = [], scalar_prefetch = 0 : i64, scratch_operands = 1 : i64, tpu.core_type = #tpu.core_type<tc>} {
    %c0 = arith.constant 0 : index
    %c0_0 = arith.constant 0 : index
    %0 = vector.load %arg0[%c0, %c0_0] : memref<64x4xbf16, #tpu.memory_space<vmem>>, vector<64x4xbf16>
    %c0_1 = arith.constant 0 : index
    %c0_2 = arith.constant 0 : index
    %1 = vector.load %arg1[%c0_1, %c0_2] : memref<4x96xbf16, #tpu.memory_space<vmem>>, vector<4x96xbf16>
    %cst = arith.constant dense<0.000000e+00> : vector<64x96xf32>
    %2 = tpu.matmul %0, %1, %cst {dimension_numbers = #tpu.dot_dimension_numbers<[1], [0], [0], [1], [0, 0, 1, 1], [], []>} : vector<64x4xbf16>, vector<4x96xbf16>, vector<64x96xf32> -> vector<64x96xf32>
    %c0_3 = arith.constant 0 : index
    %c0_4 = arith.constant 0 : index
    %3 = vector.load %arg3[%c0_3, %c0_4] : memref<1x96xf32, #tpu.memory_space<vmem>>, vector<1x96xf32>
    %4 = vector.broadcast %3 : vector<1x96xf32> to vector<64x96xf32>
    %5 = arith.addf %2, %4 : vector<64x96xf32>
    %c0_5 = arith.constant 0 : index
    %c0_6 = arith.constant 0 : index
    %6 = vector.load %arg7[%c0_5, %c0_6] : memref<64x96xf32, #tpu.memory_space<vmem>>, vector<64x96xf32>
    tpu.vector_store %arg7[%c0_5, %c0_6], %5 {strides = array<i32>} : memref<64x96xf32, #tpu.memory_space<vmem>>, vector<64x96xf32>,
    %7 = tpu.iota {dimensions = array<i32: 1>} : vector<8x96xi32>
    %cst_7 = arith.constant 0.000000e+00 : f32
    %8 = vector.broadcast %cst_7 : f32 to vector<8x96xf32>
    %c0_8 = arith.constant 0 : index
    %c0_9 = arith.constant 0 : index
    %9 = vector.load %arg7[%c0_8, %c0_9] : memref<64x96xf32, #tpu.memory_space<vmem>>, vector<8x96xf32>
    %10 = arith.truncf %8 : vector<8x96xf32> to vector<8x96xbf16>
    %c0_10 = arith.constant 0 : index
    %c0_11 = arith.constant 0 : index
    %11 = vector.load %arg2[%c0_10, %c0_11] : memref<96x96xbf16, #tpu.memory_space<vmem>>, vector<96x96xbf16>
    %cst_12 = arith.constant dense<0.000000e+00> : vector<8x96xf32>
    %12 = tpu.matmul %10, %11, %cst_12 {dimension_numbers = #tpu.dot_dimension_numbers<[1], [0], [0], [1], [0, 0, 1, 1], [], []>} : vector<8x96xbf16>, vector<96x96xbf16>, vector<8x96xf32> -> vector<8x96xf32>
    %13 = arith.addf %9, %12 : vector<8x96xf32>
    %14 = math.tanh %13 : vector<8x96xf32>
    %c32_i32 = arith.constant 32 : i32
    %15 = vector.broadcast %c32_i32 : i32 to vector<8x96xi32>
    %16 = arith.cmpi slt, %7, %15 : vector<8x96xi32>
    %cst_13 = arith.constant 0.000000e+00 : f32
    %17 = vector.broadcast %cst_13 : f32 to vector<8x96xf32>
    %18 = arith.select %16, %14, %17 : vector<8x96xi1>, vector<8x96xf32>
    %c8 = arith.constant 8 : index
    %c0_14 = arith.constant 0 : index
    %19 = vector.load %arg7[%c8, %c0_14] : memref<64x96xf32, #tpu.memory_space<vmem>>, vector<8x96xf32>
    %20 = arith.truncf %18 : vector<8x96xf32> to vector<8x96xbf16>
    %c0_15 = arith.constant 0 : index
    %c0_16 = arith.constant 0 : index
    %21 = vector.load %arg2[%c0_15, %c0_16] : memref<96x96xbf16, #tpu.memory_space<vmem>>, vector<96x96xbf16>
    %cst_17 = arith.constant dense<0.000000e+00> : vector<8x96xf32>
    %22 = tpu.matmul %20, %21, %cst_17 {dimension_numbers = #tpu.dot_dimension_numbers<[1], [0], [0], [1], [0, 0, 1, 1], [], []>} : vector<8x96xbf16>, vector<96x96xbf16>, vector<8x96xf32> -> vector<8x96xf32>
    %23 = arith.addf %19, %22 : vector<8x96xf32>
    %24 = math.tanh %23 : vector<8x96xf32>
    %c64_i32 = arith.constant 64 : i32
    %25 = vector.broadcast %c64_i32 : i32 to vector<8x96xi32>
    %26 = arith.cmpi slt, %7, %25 : vector<8x96xi32>
    %cst_18 = arith.constant 0.000000e+00 : f32
    %27 = vector.broadcast %cst_18 : f32 to vector<8x96xf32>
    %28 = arith.select %26, %24, %27 : vector<8x96xi1>, vector<8x96xf32>
    %c16 = arith.constant 16 : index
    %c0_19 = arith.constant 0 : index
    %29 = vector.load %arg7[%c16, %c0_19] : memref<64x96xf32, #tpu.memory_space<vmem>>, vector<8x96xf32>
    %30 = arith.truncf %28 : vector<8x96xf32> to vector<8x96xbf16>
    %c0_20 = arith.constant 0 : index
    %c0_21 = arith.constant 0 : index
    %31 = vector.load %arg2[%c0_20, %c0_21] : memref<96x96xbf16, #tpu.memory_space<vmem>>, vector<96x96xbf16>
    %cst_22 = arith.constant dense<0.000000e+00> : vector<8x96xf32>
    %32 = tpu.matmul %30, %31, %cst_22 {dimension_numbers = #tpu.dot_dimension_numbers<[1], [0], [0], [1], [0, 0, 1, 1], [], []>} : vector<8x96xbf16>, vector<96x96xbf16>, vector<8x96xf32> -> vector<8x96xf32>
    %33 = arith.addf %29, %32 : vector<8x96xf32>
    %34 = math.tanh %33 : vector<8x96xf32>
    %c24 = arith.constant 24 : index
    %c0_23 = arith.constant 0 : index
    %35 = vector.load %arg7[%c24, %c0_23] : memref<64x96xf32, #tpu.memory_space<vmem>>, vector<8x96xf32>
    %36 = arith.truncf %34 : vector<8x96xf32> to vector<8x96xbf16>
    %c0_24 = arith.constant 0 : index
    %c0_25 = arith.constant 0 : index
    %37 = vector.load %arg2[%c0_24, %c0_25] : memref<96x96xbf16, #tpu.memory_space<vmem>>, vector<96x96xbf16>
    %cst_26 = arith.constant dense<0.000000e+00> : vector<8x96xf32>
    %38 = tpu.matmul %36, %37, %cst_26 {dimension_numbers = #tpu.dot_dimension_numbers<[1], [0], [0], [1], [0, 0, 1, 1], [], []>} : vector<8x96xbf16>, vector<96x96xbf16>, vector<8x96xf32> -> vector<8x96xf32>
    %39 = arith.addf %35, %38 : vector<8x96xf32>
    %40 = math.tanh %39 : vector<8x96xf32>
    %c32 = arith.constant 32 : index
    %c0_27 = arith.constant 0 : index
    %41 = vector.load %arg7[%c32, %c0_27] : memref<64x96xf32, #tpu.memory_space<vmem>>, vector<8x96xf32>
    %42 = arith.truncf %40 : vector<8x96xf32> to vector<8x96xbf16>
    %c0_28 = arith.constant 0 : index
    %c0_29 = arith.constant 0 : index
    %43 = vector.load %arg2[%c0_28, %c0_29] : memref<96x96xbf16, #tpu.memory_space<vmem>>, vector<96x96xbf16>
    %cst_30 = arith.constant dense<0.000000e+00> : vector<8x96xf32>
    %44 = tpu.matmul %42, %43, %cst_30 {dimension_numbers = #tpu.dot_dimension_numbers<[1], [0], [0], [1], [0, 0, 1, 1], [], []>} : vector<8x96xbf16>, vector<96x96xbf16>, vector<8x96xf32> -> vector<8x96xf32>
    %45 = arith.addf %41, %44 : vector<8x96xf32>
    %46 = math.tanh %45 : vector<8x96xf32>
    %c40 = arith.constant 40 : index
    %c0_31 = arith.constant 0 : index
    %47 = vector.load %arg7[%c40, %c0_31] : memref<64x96xf32, #tpu.memory_space<vmem>>, vector<8x96xf32>
    %48 = arith.truncf %46 : vector<8x96xf32> to vector<8x96xbf16>
    %c0_32 = arith.constant 0 : index
    %c0_33 = arith.constant 0 : index
    %49 = vector.load %arg2[%c0_32, %c0_33] : memref<96x96xbf16, #tpu.memory_space<vmem>>, vector<96x96xbf16>
    %cst_34 = arith.constant dense<0.000000e+00> : vector<8x96xf32>
    %50 = tpu.matmul %48, %49, %cst_34 {dimension_numbers = #tpu.dot_dimension_numbers<[1], [0], [0], [1], [0, 0, 1, 1], [], []>} : vector<8x96xbf16>, vector<96x96xbf16>, vector<8x96xf32> -> vector<8x96xf32>
    %51 = arith.addf %47, %50 : vector<8x96xf32>
    %52 = math.tanh %51 : vector<8x96xf32>
    %c48 = arith.constant 48 : index
    %c0_35 = arith.constant 0 : index
    %53 = vector.load %arg7[%c48, %c0_35] : memref<64x96xf32, #tpu.memory_space<vmem>>, vector<8x96xf32>
    %54 = arith.truncf %52 : vector<8x96xf32> to vector<8x96xbf16>
    %c0_36 = arith.constant 0 : index
    %c0_37 = arith.constant 0 : index
    %55 = vector.load %arg2[%c0_36, %c0_37] : memref<96x96xbf16, #tpu.memory_space<vmem>>, vector<96x96xbf16>
    %cst_38 = arith.constant dense<0.000000e+00> : vector<8x96xf32>
    %56 = tpu.matmul %54, %55, %cst_38 {dimension_numbers = #tpu.dot_dimension_numbers<[1], [0], [0], [1], [0, 0, 1, 1], [], []>} : vector<8x96xbf16>, vector<96x96xbf16>, vector<8x96xf32> -> vector<8x96xf32>
    %57 = arith.addf %53, %56 : vector<8x96xf32>
    %58 = math.tanh %57 : vector<8x96xf32>
    %c56 = arith.constant 56 : index
    %c0_39 = arith.constant 0 : index
    %59 = vector.load %arg7[%c56, %c0_39] : memref<64x96xf32, #tpu.memory_space<vmem>>, vector<8x96xf32>
    %60 = arith.truncf %58 : vector<8x96xf32> to vector<8x96xbf16>
    %c0_40 = arith.constant 0 : index
    %c0_41 = arith.constant 0 : index
    %61 = vector.load %arg2[%c0_40, %c0_41] : memref<96x96xbf16, #tpu.memory_space<vmem>>, vector<96x96xbf16>
    %cst_42 = arith.constant dense<0.000000e+00> : vector<8x96xf32>
    %62 = tpu.matmul %60, %61, %cst_42 {dimension_numbers = #tpu.dot_dimension_numbers<[1], [0], [0], [1], [0, 0, 1, 1], [], []>} : vector<8x96xbf16>, vector<96x96xbf16>, vector<8x96xf32> -> vector<8x96xf32>
    %63 = arith.addf %59, %62 : vector<8x96xf32>
    %64 = math.tanh %63 : vector<8x96xf32>
    %c56_43 = arith.constant 56 : index
    %c0_44 = arith.constant 0 : index
    %65 = vector.load %arg7[%c56_43, %c0_44] : memref<64x96xf32, #tpu.memory_space<vmem>>, vector<8x96xf32>
    %66 = arith.truncf %64 : vector<8x96xf32> to vector<8x96xbf16>
    %c0_45 = arith.constant 0 : index
    %c0_46 = arith.constant 0 : index
    %67 = vector.load %arg2[%c0_45, %c0_46] : memref<96x96xbf16, #tpu.memory_space<vmem>>, vector<96x96xbf16>
    %cst_47 = arith.constant dense<0.000000e+00> : vector<8x96xf32>
    %68 = tpu.matmul %66, %67, %cst_47 {dimension_numbers = #tpu.dot_dimension_numbers<[1], [0], [0], [1], [0, 0, 1, 1], [], []>} : vector<8x96xbf16>, vector<96x96xbf16>, vector<8x96xf32> -> vector<8x96xf32>
    %69 = arith.addf %65, %68 : vector<8x96xf32>
    %70 = math.tanh %69 : vector<8x96xf32>
    %c56_48 = arith.constant 56 : index
    %c0_49 = arith.constant 0 : index
    %71 = vector.load %arg7[%c56_48, %c0_49] : memref<64x96xf32, #tpu.memory_space<vmem>>, vector<8x96xf32>
    %72 = arith.truncf %70 : vector<8x96xf32> to vector<8x96xbf16>
    %c0_50 = arith.constant 0 : index
    %c0_51 = arith.constant 0 : index
    %73 = vector.load %arg2[%c0_50, %c0_51] : memref<96x96xbf16, #tpu.memory_space<vmem>>, vector<96x96xbf16>
    %cst_52 = arith.constant dense<0.000000e+00> : vector<8x96xf32>
    %74 = tpu.matmul %72, %73, %cst_52 {dimension_numbers = #tpu.dot_dimension_numbers<[1], [0], [0], [1], [0, 0, 1, 1], [], []>} : vector<8x96xbf16>, vector<96x96xbf16>, vector<8x96xf32> -> vector<8x96xf32>
    %75 = arith.addf %71, %74 : vector<8x96xf32>
    %76 = math.tanh %75 : vector<8x96xf32>
    %c0_53 = arith.constant 0 : index
    %c0_54 = arith.constant 0 : index
    %77 = vector.load %arg4[%c0_53, %c0_54] : memref<1x96xf32, #tpu.memory_space<vmem>>, vector<1x96xf32>
    %78 = vector.broadcast %77 : vector<1x96xf32> to vector<8x96xf32>
    %79 = arith.mulf %76, %78 : vector<8x96xf32>
    %cst_55 = arith.constant dense<0.000000e+00> : vector<8xf32>
    %80 = vector.multi_reduction <add>, %79, %cst_55 [1] : vector<8x96xf32> to vector<8xf32>
    %81 = vector.shape_cast %80 : vector<8xf32> to vector<8x1xf32>
    %c0_56 = arith.constant 0 : index
    %c0_57 = arith.constant 0 : index
    %82 = vector.load %arg5[%c0_56, %c0_57] : memref<1x1xf32, #tpu.memory_space<vmem>>, vector<1x1xf32>
    %83 = vector.broadcast %82 : vector<1x1xf32> to vector<8x1xf32>
    %84 = arith.addf %81, %83 : vector<8x1xf32>
    %c0_58 = arith.constant 0 : index
    %c0_59 = arith.constant 0 : index
    %85 = vector.load %arg6[%c0_58, %c0_59] : memref<8x1xf32, #tpu.memory_space<vmem>>, vector<8x1xf32>
    tpu.vector_store %arg6[%c0_58, %c0_59], %84 {strides = array<i32>} : memref<8x1xf32, #tpu.memory_space<vmem>>, vector<8x1xf32>,
    return
  }
}

</mosaic_0001>

<llo_original>
// kernel: tpu_custom_call.1
$region0: #{tpu_custom_call.1}
  #allocation0 [shape = 'u32[]', space=smem, size = 0x4, offset = 0x4, fixed_abs, tag = 'smem constant byte address 0x4 - core index']
  #allocation1 [shape = 'u32[144,128]{1,0:T(1,128)}', space=vmem, size = 0x12000, scoped, tag = 'internal scratch']
  #allocation2 [shape = 'f32[64,96]{1,0:T(8,128)}', space=vmem, size = 0x8000, scoped, tag = 'scratch operand']
  #allocation3 [shape = 'f32[1,1]{1,0:T(1,128)S(1)}', space=vmem, size = 0x200, scoped, tag = 'scoped memory for tpu_custom_call.1']
  %s0 = inlined_call_operand.vmem [shape: bf16[64,4], index: 0, kind: input, shape index: {}]
  %s1 = inlined_call_operand.vmem [shape: bf16[4,96], index: 1, kind: input, shape index: {}]
  %s2 = inlined_call_operand.hbm [shape: bf16[96,96], index: 2, kind: input, shape index: {}]
  %s3 = inlined_call_operand.vmem [shape: f32[1,96], index: 3, kind: input, shape index: {}]
  %s4 = inlined_call_operand.vmem [shape: f32[1,96], index: 4, kind: input, shape index: {}]
  %s5 = inlined_call_operand.<no memory space> [shape: f32[1,1], index: 5, kind: input, shape index: {}]
  %s6 = inlined_call_operand.vmem [shape: f32[8,1], index: 6, kind: output, shape index: {}]
  %s7 = sld [smem:[#allocation0]]
  $region38: #{tpu_custom_call.1} parent=0
    _
  %s9 = ssub.s32 1, %s7
  %s10 = scalar_select 0, %s9, %s7
  %v11 = vstv %s5
  %12 = vst [vmem:[#allocation3] sm:$0x1] %v11
  $region1: #{tpu_custom_call.1} parent=0
    #allocation4 [shape = 'u8[24576]{0}', space=vmem, size = 0x6000, scoped, tag = 'input window, operand 2, single buffered']
    #allocation5 [shape = 's32[1]{0}', space=sflag, size = 0x4, scoped, tag = 'scoped memory for tpu_custom_call.1']
    %13 = vsyncpa [#allocation5], 0
    // Predicated region
    $region2: #{tpu_custom_call.1} parent=1 // pred_check
      _
    $region3: #{tpu_custom_call.1} parent=1 // pred_check_branch
      %15 = sbr.rel (0) target = $region5
    $region4: #{tpu_custom_call.1} parent=1 // pred_region
      _
    $region5: #{tpu_custom_call.1} parent=1 // pred_fallthru
      _
    // Predicated region
    $region6: #{tpu_custom_call.1} parent=1 // pred_check
      _
    $region7: #{tpu_custom_call.1} parent=1 // pred_check_branch
      %17 = sbr.rel (0) target = $region9
    $region8: #{tpu_custom_call.1} parent=1 // pred_region
      _
    $region9: #{tpu_custom_call.1} parent=1 // pred_fallthru
      _
    // Predicated region
    $region10: #{tpu_custom_call.1} parent=1 // pred_check
      _
    $region11: #{tpu_custom_call.1} parent=1 // pred_check_branch
      %19 = sbr.rel (0) target = $region13
    $region12: #{tpu_custom_call.1} parent=1 // pred_region
      %s21 = ssub.s32 768, 768
      %22 = vsyncadd [#allocation5], %s21
      %s23 = sshll.u32 [#allocation4], 4
      %s24 = int_to_ptr.vmem [resolvable:$true] %s23
      %29 = dma.hbm_to_vmem [thread:$0]  %s2, 768, %s24, [#allocation5], 64, 64, 4
    $region13: #{tpu_custom_call.1} parent=1 // pred_fallthru
      _
    // Predicated region
    $region14: #{tpu_custom_call.1} parent=1 // pred_check
      _
    $region15: #{tpu_custom_call.1} parent=1 // pred_check_branch
      %31 = sbr.rel (0) target = $region17
    $region16: #{tpu_custom_call.1} parent=1 // pred_region
      _
    $region17: #{tpu_custom_call.1} parent=1 // pred_fallthru
      _
    // Predicated region
    $region18: #{tpu_custom_call.1} parent=1 // pred_check
      _
    $region19: #{tpu_custom_call.1} parent=1 // pred_check_branch
      %33 = sbr.rel (0) target = $region21
    $region20: #{tpu_custom_call.1} parent=1 // pred_region
      _
    $region21: #{tpu_custom_call.1} parent=1 // pred_fallthru
      _
    // Predicated region
    $region22: #{tpu_custom_call.1} parent=1 // pred_check
      _
    $region23: #{tpu_custom_call.1} parent=1 // pred_check_branch
      %35 = sbr.rel (0) target = $region25
    $region24: #{tpu_custom_call.1} parent=1 // pred_region
      _
    $region25: #{tpu_custom_call.1} parent=1 // pred_fallthru
      _
    // Predicated region
    $region26: #{tpu_custom_call.1} parent=1 // pred_check
      _
    $region27: #{tpu_custom_call.1} parent=1 // pred_check_branch
      %37 = sbr.rel (0) target = $region29
    $region28: #{tpu_custom_call.1} parent=1 // pred_region
      %38 = dma.done [#allocation5], 768
    $region29: #{tpu_custom_call.1} parent=1 // pred_fallthru
      _
    %v40 = vld [vmem:[%s0] sm:$0xf]
    %v41 = vld [vmem:[%s0 + $0x4] sm:$0xf]
    %v42 = vld [vmem:[%s0 + $0x8] sm:$0xf]
    %v43 = vld [vmem:[%s0 + $0xc] sm:$0xf]
    %v44 = vld [vmem:[%s0 + $0x10] sm:$0xf]
    %v45 = vld [vmem:[%s0 + $0x14] sm:$0xf]
    %v46 = vld [vmem:[%s0 + $0x18] sm:$0xf]
    %v47 = vld [vmem:[%s0 + $0x1c] sm:$0xf]
    %v48 = vld [vmem:[%s1] sm:$0x3]
    %v49 = vld [vmem:[%s3] sm:$0x1]
    %v51 = vlaneseq
    %v52 = vshrl.u32 %v51, 7
    %v53 = vsub.s32 0, %v52
    %v54 = vrot.slane %v49, %v53
    %v64 = vunpack.c.l.b16 %v40
    %v65 = vunpack.c.l.b16 %v41
    %v66 = vunpack.c.l.b16 %v42
    %v67 = vunpack.c.l.b16 %v43
    %v68 = vunpack.c.l.b16 %v44
    %v69 = vunpack.c.l.b16 %v45
    %v70 = vunpack.c.l.b16 %v46
    %v71 = vunpack.c.l.b16 %v47
    %v72 = vpack.c.b16 %v65, %v64
    %v73 = vpack.c.b16 %v67, %v66
    %v74 = vpack.c.b16 %v69, %v68
    %v75 = vpack.c.b16 %v71, %v70
    %vm76 = vcmask 31744
    %v78 = vsel %vm76, %v72, 0
    %v81 = vsel %vm76, %v73, 0
    %v84 = vsel %vm76, %v74, 0
    %v87 = vsel %vm76, %v75, 0
    %vm89 = vcmask 1041408
    %v91 = vsel %vm89, %v48, 0
    %93 = vmatprep.subr.bf16.mxu0 0
    %94 = vmatpush1.bf16.msra.mxu0 %v91
    %95 = vmatprep.subr.bf16.mxu0 0
    %96 = vmatpush1.bf16.msra.mxu0 0
    %97 = vmatprep.subr.bf16.mxu0 0
    %98 = vmatpush1.bf16.msra.mxu0 0
    %99 = vmatprep.subr.bf16.mxu0 0
    %100 = vmatpush1.bf16.msra.mxu0 0
    %101 = vmatprep.subr.bf16.mxu0 0
    %102 = vmatpush1.bf16.msra.mxu0 0
    %103 = vmatprep.subr.bf16.mxu0 0
    %104 = vmatpush1.bf16.msra.mxu0 0
    %105 = vmatprep.subr.bf16.mxu0 0
    %106 = vmatpush1.bf16.msra.mxu0 0
    %107 = vmatprep.subr.bf16.mxu0 0
    %108 = vmatpush1.bf16.msra.mxu0 0
    %109 = vmatprep.subr.bf16.mxu0 0
    %110 = vmatpush1.bf16.msra.mxu0 0
    %111 = vmatprep.subr.bf16.mxu0 0
    %112 = vmatpush1.bf16.msra.mxu0 0
    %113 = vmatprep.subr.bf16.mxu0 0
    %114 = vmatpush1.bf16.msra.mxu0 0
    %115 = vmatprep.subr.bf16.mxu0 0
    %116 = vmatpush1.bf16.msra.mxu0 0
    %117 = vmatprep.subr.bf16.mxu0 0
    %118 = vmatpush1.bf16.msra.mxu0 0
    %119 = vmatprep.subr.bf16.mxu0 0
    %120 = vmatpush1.bf16.msra.mxu0 0
    %121 = vmatprep.subr.bf16.mxu0 0
    %122 = vmatpush1.bf16.msra.mxu0 0
    %123 = vmatprep.subr.bf16.mxu0 0
    %124 = vmatpush1.bf16.msra.mxu0 0
    %125 = vmatprep.mubr.bf16.mxu0 0
    %126 = vmatmul.mubr.bf16.gmra.mrb[0].mxu0 %v78
    %v127 = vpop.f32.mrb[0].mxu0
    %v128 = vadd.f32 %v54, %v127
    %v129 = vpop.f32.mrb[0].mxu0
    %v130 = vpop.f32.mrb[0].mxu0
    %v131 = vadd.f32 %v54, %v130
    %v132 = vpop.f32.mrb[0].mxu0
    %133 = vmatprep.mubr.bf16.mxu0 0
    %134 = vmatmul.mubr.bf16.gmra.mrb[0].mxu0 %v81
    %v135 = vpop.f32.mrb[0].mxu0
    %v136 = vadd.f32 %v54, %v135
    %v137 = vpop.f32.mrb[0].mxu0
    %v138 = vpop.f32.mrb[0].mxu0
    %v139 = vadd.f32 %v54, %v138
    %v140 = vpop.f32.mrb[0].mxu0
    %141 = vmatprep.mubr.bf16.mxu0 0
    %142 = vmatmul.mubr.bf16.gmra.mrb[0].mxu0 %v84
    %v143 = vpop.f32.mrb[0].mxu0
    %v144 = vadd.f32 %v54, %v143
    %v145 = vpop.f32.mrb[0].mxu0
    %v146 = vpop.f32.mrb[0].mxu0
    %v147 = vadd.f32 %v54, %v146
    %v148 = vpop.f32.mrb[0].mxu0
    %149 = vmatprep.mubr.bf16.mxu0 0
    %150 = vmatmul.mubr.bf16.gmra.mrb[0].mxu0 %v87
    %v151 = vpop.f32.mrb[0].mxu0
    %v152 = vadd.f32 %v54, %v151
    %v153 = vpop.f32.mrb[0].mxu0
    %v154 = vpop.f32.mrb[0].mxu0
    %v155 = vadd.f32 %v54, %v154
    %v156 = vpop.f32.mrb[0].mxu0
    %157 = vdwg.mxu0
    %vm158 = vcmask 785408
    %159 = vst.msk [vmem:[#allocation2] sm:$0xff] %vm158, %v128
    %160 = vst.msk [vmem:[#allocation2 + $0x8] sm:$0xff] %vm158, %v131
    %161 = vst.msk [vmem:[#allocation2 + $0x10] sm:$0xff] %vm158, %v136
    %162 = vst.msk [vmem:[#allocation2 + $0x18] sm:$0xff] %vm158, %v139
    %163 = vst.msk [vmem:[#allocation2 + $0x20] sm:$0xff] %vm158, %v144
    %164 = vst.msk [vmem:[#allocation2 + $0x28] sm:$0xff] %vm158, %v147
    %165 = vst.msk [vmem:[#allocation2 + $0x30] sm:$0xff] %vm158, %v152
    %166 = vst.msk [vmem:[#allocation2 + $0x38] sm:$0xff] %vm158, %v155
    %v167 = vlaneseq
    %v168 = vand.u32 %v167, 127
    %v169 = vld [vmem:[#allocation2] sm:$0xff]
    %v170 = vld [vmem:[#allocation4] sm:$0xf]
    %v171 = vld [vmem:[#allocation4 + $0x4] sm:$0xf]
    %v172 = vld [vmem:[#allocation4 + $0x8] sm:$0xf]
    %v173 = vld [vmem:[#allocation4 + $0xc] sm:$0xf]
    %v174 = vld [vmem:[#allocation4 + $0x10] sm:$0xf]
    %v175 = vld [vmem:[#allocation4 + $0x14] sm:$0xf]
    %v176 = vld [vmem:[#allocation4 + $0x18] sm:$0xf]
    %v177 = vld [vmem:[#allocation4 + $0x1c] sm:$0xf]
    %v178 = vld [vmem:[#allocation4 + $0x20] sm:$0xf]
    %v179 = vld [vmem:[#allocation4 + $0x24] sm:$0xf]
    %v180 = vld [vmem:[#allocation4 + $0x28] sm:$0xf]
    %v181 = vld [vmem:[#allocation4 + $0x2c] sm:$0xf]
    %v194 = vunpack.c.l.b16 %v170
    %v195 = vunpack.c.l.b16 %v171
    %v196 = vunpack.c.l.b16 %v172
    %v197 = vunpack.c.l.b16 %v173
    %v198 = vunpack.c.l.b16 %v174
    %v199 = vunpack.c.l.b16 %v175
    %v200 = vunpack.c.l.b16 %v176
    %v201 = vunpack.c.l.b16 %v177
    %v202 = vunpack.c.l.b16 %v178
    %v203 = vunpack.c.l.b16 %v179
    %v204 = vunpack.c.l.b16 %v180
    %v205 = vunpack.c.l.b16 %v181
    %v206 = vpack.c.b16 %v195, %v194
    %v207 = vpack.c.b16 %v197, %v196
    %v208 = vpack.c.b16 %v199, %v198
    %v209 = vpack.c.b16 %v201, %v200
    %v210 = vpack.c.b16 %v203, %v202
    %v211 = vpack.c.b16 %v205, %v204
    %v219 = vsel %vm158, 0, 0
    %221 = vmatprep.subr.bf16.mxu0 0
    %222 = vmatpush1.bf16.msra.mxu0 %v206
    %223 = vmatprep.subr.bf16.mxu0 0
    %224 = vmatpush1.bf16.msra.mxu0 %v207
    %225 = vmatprep.subr.bf16.mxu0 0
    %226 = vmatpush1.bf16.msra.mxu0 %v208
    %227 = vmatprep.subr.bf16.mxu0 0
    %228 = vmatpush1.bf16.msra.mxu0 %v209
    %229 = vmatprep.subr.bf16.mxu0 0
    %230 = vmatpush1.bf16.msra.mxu0 %v210
    %231 = vmatprep.subr.bf16.mxu0 0
    %232 = vmatpush1.bf16.msra.mxu0 %v211
    %233 = vmatprep.subr.bf16.mxu0 0
    %234 = vmatpush1.bf16.msra.mxu0 0
    %235 = vmatprep.subr.bf16.mxu0 0
    %236 = vmatpush1.bf16.msra.mxu0 0
    %237 = vmatprep.subr.bf16.mxu0 0
    %238 = vmatpush1.bf16.msra.mxu0 0
    %239 = vmatprep.subr.bf16.mxu0 0
    %240 = vmatpush1.bf16.msra.mxu0 0
    %241 = vmatprep.subr.bf16.mxu0 0
    %242 = vmatpush1.bf16.msra.mxu0 0
    %243 = vmatprep.subr.bf16.mxu0 0
    %244 = vmatpush1.bf16.msra.mxu0 0
    %245 = vmatprep.subr.bf16.mxu0 0
    %246 = vmatpush1.bf16.msra.mxu0 0
    %247 = vmatprep.subr.bf16.mxu0 0
    %248 = vmatpush1.bf16.msra.mxu0 0
    %249 = vmatprep.subr.bf16.mxu0 0
    %250 = vmatpush1.bf16.msra.mxu0 0
    %251 = vmatprep.subr.bf16.mxu0 0
    %252 = vmatpush1.bf16.msra.mxu0 0
    %253 = vmatprep.mubr.bf16.mxu0 0
    %254 = vmatmul.mubr.bf16.gmra.mrb[0].mxu0 %v219
    %v255 = vpop.f32.mrb[0].mxu0
    %v256 = vadd.f32 0.0, %v255
    %v257 = vpop.f32.mrb[0].mxu0
    %v258 = vpop.f32.mrb[0].mxu0
    %v259 = vpop.f32.mrb[0].mxu0
    %260 = vdwg.mxu0
    %v261 = vadd.f32 %v169, %v256
    %v262 = vtanh.pop %v261
    %vm263 = vcmp.lt.s32.totalorder %v168, 32
    %v264 = vsel %vm263, %v262, 0.0
    %v265 = vld [vmem:[#allocation2 + $0x8] sm:$0xff]
    %v266 = vpack.c.bf16 %v264, %v264
    %v268 = vsel %vm158, %v266, 0
    %270 = vmatprep.subr.bf16.mxu0 0
    %271 = vmatpush1.bf16.msra.mxu0 %v206
    %272 = vmatprep.subr.bf16.mxu0 0
    %273 = vmatpush1.bf16.msra.mxu0 %v207
    %274 = vmatprep.subr.bf16.mxu0 0
    %275 = vmatpush1.bf16.msra.mxu0 %v208
    %276 = vmatprep.subr.bf16.mxu0 0
    %277 = vmatpush1.bf16.msra.mxu0 %v209
    %278 = vmatprep.subr.bf16.mxu0 0
    %279 = vmatpush1.bf16.msra.mxu0 %v210
    %280 = vmatprep.subr.bf16.mxu0 0
    %281 = vmatpush1.bf16.msra.mxu0 %v211
    %282 = vmatprep.subr.bf16.mxu0 0
    %283 = vmatpush1.bf16.msra.mxu0 0
    %284 = vmatprep.subr.bf16.mxu0 0
    %285 = vmatpush1.bf16.msra.mxu0 0
    %286 = vmatprep.subr.bf16.mxu0 0
    %287 = vmatpush1.bf16.msra.mxu0 0
    %288 = vmatprep.subr.bf16.mxu0 0
    %289 = vmatpush1.bf16.msra.mxu0 0
    %290 = vmatprep.subr.bf16.mxu0 0
    %291 = vmatpush1.bf16.msra.mxu0 0
    %292 = vmatprep.subr.bf16.mxu0 0
    %293 = vmatpush1.bf16.msra.mxu0 0
    %294 = vmatprep.subr.bf16.mxu0 0
    %295 = vmatpush1.bf16.msra.mxu0 0
    %296 = vmatprep.subr.bf16.mxu0 0
    %297 = vmatpush1.bf16.msra.mxu0 0
    %298 = vmatprep.subr.bf16.mxu0 0
    %299 = vmatpush1.bf16.msra.mxu0 0
    %300 = vmatprep.subr.bf16.mxu0 0
    %301 = vmatpush1.bf16.msra.mxu0 0
    %302 = vmatprep.mubr.bf16.mxu0 0
    %303 = vmatmul.mubr.bf16.gmra.mrb[0].mxu0 %v268
    %v304 = vpop.f32.mrb[0].mxu0
    %v305 = vadd.f32 0.0, %v304
    %v306 = vpop.f32.mrb[0].mxu0
    %v307 = vpop.f32.mrb[0].mxu0
    %v308 = vpop.f32.mrb[0].mxu0
    %309 = vdwg.mxu0
    %v310 = vadd.f32 %v265, %v305
    %v311 = vtanh.pop %v310
    %vm312 = vcmp.lt.s32.totalorder %v168, 64
    %v313 = vsel %vm312, %v311, 0.0
    %v314 = vld [vmem:[#allocation2 + $0x10] sm:$0xff]
    %v315 = vpack.c.bf16 %v313, %v313
    %v317 = vsel %vm158, %v315, 0
    %319 = vmatprep.subr.bf16.mxu0 0
    %320 = vmatpush1.bf16.msra.mxu0 %v206
    %321 = vmatprep.subr.bf16.mxu0 0
    %322 = vmatpush1.bf16.msra.mxu0 %v207
    %323 = vmatprep.subr.bf16.mxu0 0
    %324 = vmatpush1.bf16.msra.mxu0 %v208
    %325 = vmatprep.subr.bf16.mxu0 0
    %326 = vmatpush1.bf16.msra.mxu0 %v209
    %327 = vmatprep.subr.bf16.mxu0 0
    %328 = vmatpush1.bf16.msra.mxu0 %v210
    %329 = vmatprep.subr.bf16.mxu0 0
    %330 = vmatpush1.bf16.msra.mxu0 %v211
    %331 = vmatprep.subr.bf16.mxu0 0
    %332 = vmatpush1.bf16.msra.mxu0 0
    %333 = vmatprep.subr.bf16.mxu0 0
    %334 = vmatpush1.bf16.msra.mxu0 0
    %335 = vmatprep.subr.bf16.mxu0 0
    %336 = vmatpush1.bf16.msra.mxu0 0
    %337 = vmatprep.subr.bf16.mxu0 0
    %338 = vmatpush1.bf16.msra.mxu0 0
    %339 = vmatprep.subr.bf16.mxu0 0
    %340 = vmatpush1.bf16.msra.mxu0 0
    %341 = vmatprep.subr.bf16.mxu0 0
    %342 = vmatpush1.bf16.msra.mxu0 0
    %343 = vmatprep.subr.bf16.mxu0 0
    %344 = vmatpush1.bf16.msra.mxu0 0
    %345 = vmatprep.subr.bf16.mxu0 0
    %346 = vmatpush1.bf16.msra.mxu0 0
    %347 = vmatprep.subr.bf16.mxu0 0
    %348 = vmatpush1.bf16.msra.mxu0 0
    %349 = vmatprep.subr.bf16.mxu0 0
    %350 = vmatpush1.bf16.msra.mxu0 0
    %351 = vmatprep.mubr.bf16.mxu0 0
    %352 = vmatmul.mubr.bf16.gmra.mrb[0].mxu0 %v317
    %v353 = vpop.f32.mrb[0].mxu0
    %v354 = vadd.f32 0.0, %v353
    %v355 = vpop.f32.mrb[0].mxu0
    %v356 = vpop.f32.mrb[0].mxu0
    %v357 = vpop.f32.mrb[0].mxu0
    %358 = vdwg.mxu0
    %v359 = vadd.f32 %v314, %v354
    %v360 = vtanh.pop %v359
    %v361 = vld [vmem:[#allocation2 + $0x18] sm:$0xff]
    %v362 = vpack.c.bf16 %v360, %v360
    %v364 = vsel %vm158, %v362, 0
    %366 = vmatprep.subr.bf16.mxu0 0
    %367 = vmatpush1.bf16.msra.mxu0 %v206
    %368 = vmatprep.subr.bf16.mxu0 0
    %369 = vmatpush1.bf16.msra.mxu0 %v207
    %370 = vmatprep.subr.bf16.mxu0 0
    %371 = vmatpush1.bf16.msra.mxu0 %v208
    %372 = vmatprep.subr.bf16.mxu0 0
    %373 = vmatpush1.bf16.msra.mxu0 %v209
    %374 = vmatprep.subr.bf16.mxu0 0
    %375 = vmatpush1.bf16.msra.mxu0 %v210
    %376 = vmatprep.subr.bf16.mxu0 0
    %377 = vmatpush1.bf16.msra.mxu0 %v211
    %378 = vmatprep.subr.bf16.mxu0 0
    %379 = vmatpush1.bf16.msra.mxu0 0
    %380 = vmatprep.subr.bf16.mxu0 0
    %381 = vmatpush1.bf16.msra.mxu0 0
    %382 = vmatprep.subr.bf16.mxu0 0
    %383 = vmatpush1.bf16.msra.mxu0 0
    %384 = vmatprep.subr.bf16.mxu0 0
    %385 = vmatpush1.bf16.msra.mxu0 0
    %386 = vmatprep.subr.bf16.mxu0 0
    %387 = vmatpush1.bf16.msra.mxu0 0
    %388 = vmatprep.subr.bf16.mxu0 0
    %389 = vmatpush1.bf16.msra.mxu0 0
    %390 = vmatprep.subr.bf16.mxu0 0
    %391 = vmatpush1.bf16.msra.mxu0 0
    %392 = vmatprep.subr.bf16.mxu0 0
    %393 = vmatpush1.bf16.msra.mxu0 0
    %394 = vmatprep.subr.bf16.mxu0 0
    %395 = vmatpush1.bf16.msra.mxu0 0
    %396 = vmatprep.subr.bf16.mxu0 0
    %397 = vmatpush1.bf16.msra.mxu0 0
    %398 = vmatprep.mubr.bf16.mxu0 0
    %399 = vmatmul.mubr.bf16.gmra.mrb[0].mxu0 %v364
    %v400 = vpop.f32.mrb[0].mxu0
    %v401 = vadd.f32 0.0, %v400
    %v402 = vpop.f32.mrb[0].mxu0
    %v403 = vpop.f32.mrb[0].mxu0
    %v404 = vpop.f32.mrb[0].mxu0
    %405 = vdwg.mxu0
    %v406 = vadd.f32 %v361, %v401
    %v407 = vtanh.pop %v406
    %v408 = vld [vmem:[#allocation2 + $0x20] sm:$0xff]
    %v409 = vpack.c.bf16 %v407, %v407
    %v411 = vsel %vm158, %v409, 0
    %413 = vmatprep.subr.bf16.mxu0 0
    %414 = vmatpush1.bf16.msra.mxu0 %v206
    %415 = vmatprep.subr.bf16.mxu0 0
    %416 = vmatpush1.bf16.msra.mxu0 %v207
    %417 = vmatprep.subr.bf16.mxu0 0
    %418 = vmatpush1.bf16.msra.mxu0 %v208
    %419 = vmatprep.subr.bf16.mxu0 0
    %420 = vmatpush1.bf16.msra.mxu0 %v209
    %421 = vmatprep.subr.bf16.mxu0 0
    %422 = vmatpush1.bf16.msra.mxu0 %v210
    %423 = vmatprep.subr.bf16.mxu0 0
    %424 = vmatpush1.bf16.msra.mxu0 %v211
    %425 = vmatprep.subr.bf16.mxu0 0
    %426 = vmatpush1.bf16.msra.mxu0 0
    %427 = vmatprep.subr.bf16.mxu0 0
    %428 = vmatpush1.bf16.msra.mxu0 0
    %429 = vmatprep.subr.bf16.mxu0 0
    %430 = vmatpush1.bf16.msra.mxu0 0
    %431 = vmatprep.subr.bf16.mxu0 0
    %432 = vmatpush1.bf16.msra.mxu0 0
    %433 = vmatprep.subr.bf16.mxu0 0
    %434 = vmatpush1.bf16.msra.mxu0 0
    %435 = vmatprep.subr.bf16.mxu0 0
    %436 = vmatpush1.bf16.msra.mxu0 0
    %437 = vmatprep.subr.bf16.mxu0 0
    %438 = vmatpush1.bf16.msra.mxu0 0
    %439 = vmatprep.subr.bf16.mxu0 0
    %440 = vmatpush1.bf16.msra.mxu0 0
    %441 = vmatprep.subr.bf16.mxu0 0
    %442 = vmatpush1.bf16.msra.mxu0 0
    %443 = vmatprep.subr.bf16.mxu0 0
    %444 = vmatpush1.bf16.msra.mxu0 0
    %445 = vmatprep.mubr.bf16.mxu0 0
    %446 = vmatmul.mubr.bf16.gmra.mrb[0].mxu0 %v411
    %v447 = vpop.f32.mrb[0].mxu0
    %v448 = vadd.f32 0.0, %v447
    %v449 = vpop.f32.mrb[0].mxu0
    %v450 = vpop.f32.mrb[0].mxu0
    %v451 = vpop.f32.mrb[0].mxu0
    %452 = vdwg.mxu0
    %v453 = vadd.f32 %v408, %v448
    %v454 = vtanh.pop %v453
    %v455 = vld [vmem:[#allocation2 + $0x28] sm:$0xff]
    %v456 = vpack.c.bf16 %v454, %v454
    %v458 = vsel %vm158, %v456, 0
    %460 = vmatprep.subr.bf16.mxu0 0
    %461 = vmatpush1.bf16.msra.mxu0 %v206
    %462 = vmatprep.subr.bf16.mxu0 0
    %463 = vmatpush1.bf16.msra.mxu0 %v207
    %464 = vmatprep.subr.bf16.mxu0 0
    %465 = vmatpush1.bf16.msra.mxu0 %v208
    %466 = vmatprep.subr.bf16.mxu0 0
    %467 = vmatpush1.bf16.msra.mxu0 %v209
    %468 = vmatprep.subr.bf16.mxu0 0
    %469 = vmatpush1.bf16.msra.mxu0 %v210
    %470 = vmatprep.subr.bf16.mxu0 0
    %471 = vmatpush1.bf16.msra.mxu0 %v211
    %472 = vmatprep.subr.bf16.mxu0 0
    %473 = vmatpush1.bf16.msra.mxu0 0
    %474 = vmatprep.subr.bf16.mxu0 0
    %475 = vmatpush1.bf16.msra.mxu0 0
    %476 = vmatprep.subr.bf16.mxu0 0
    %477 = vmatpush1.bf16.msra.mxu0 0
    %478 = vmatprep.subr.bf16.mxu0 0
    %479 = vmatpush1.bf16.msra.mxu0 0
    %480 = vmatprep.subr.bf16.mxu0 0
    %481 = vmatpush1.bf16.msra.mxu0 0
    %482 = vmatprep.subr.bf16.mxu0 0
    %483 = vmatpush1.bf16.msra.mxu0 0
    %484 = vmatprep.subr.bf16.mxu0 0
    %485 = vmatpush1.bf16.msra.mxu0 0
    %486 = vmatprep.subr.bf16.mxu0 0
    %487 = vmatpush1.bf16.msra.mxu0 0
    %488 = vmatprep.subr.bf16.mxu0 0
    %489 = vmatpush1.bf16.msra.mxu0 0
    %490 = vmatprep.subr.bf16.mxu0 0
    %491 = vmatpush1.bf16.msra.mxu0 0
    %492 = vmatprep.mubr.bf16.mxu0 0
    %493 = vmatmul.mubr.bf16.gmra.mrb[0].mxu0 %v458
    %v494 = vpop.f32.mrb[0].mxu0
    %v495 = vadd.f32 0.0, %v494
    %v496 = vpop.f32.mrb[0].mxu0
    %v497 = vpop.f32.mrb[0].mxu0
    %v498 = vpop.f32.mrb[0].mxu0
    %499 = vdwg.mxu0
    %v500 = vadd.f32 %v455, %v495
    %v501 = vtanh.pop %v500
    %v502 = vld [vmem:[#allocation2 + $0x30] sm:$0xff]
    %v503 = vpack.c.bf16 %v501, %v501
    %v505 = vsel %vm158, %v503, 0
    %507 = vmatprep.subr.bf16.mxu0 0
    %508 = vmatpush1.bf16.msra.mxu0 %v206
    %509 = vmatprep.subr.bf16.mxu0 0
    %510 = vmatpush1.bf16.msra.mxu0 %v207
    %511 = vmatprep.subr.bf16.mxu0 0
    %512 = vmatpush1.bf16.msra.mxu0 %v208
    %513 = vmatprep.subr.bf16.mxu0 0
    %514 = vmatpush1.bf16.msra.mxu0 %v209
    %515 = vmatprep.subr.bf16.mxu0 0
    %516 = vmatpush1.bf16.msra.mxu0 %v210
    %517 = vmatprep.subr.bf16.mxu0 0
    %518 = vmatpush1.bf16.msra.mxu0 %v211
    %519 = vmatprep.subr.bf16.mxu0 0
    %520 = vmatpush1.bf16.msra.mxu0 0
    %521 = vmatprep.subr.bf16.mxu0 0
    %522 = vmatpush1.bf16.msra.mxu0 0
    %523 = vmatprep.subr.bf16.mxu0 0
    %524 = vmatpush1.bf16.msra.mxu0 0
    %525 = vmatprep.subr.bf16.mxu0 0
    %526 = vmatpush1.bf16.msra.mxu0 0
    %527 = vmatprep.subr.bf16.mxu0 0
    %528 = vmatpush1.bf16.msra.mxu0 0
    %529 = vmatprep.subr.bf16.mxu0 0
    %530 = vmatpush1.bf16.msra.mxu0 0
    %531 = vmatprep.subr.bf16.mxu0 0
    %532 = vmatpush1.bf16.msra.mxu0 0
    %533 = vmatprep.subr.bf16.mxu0 0
    %534 = vmatpush1.bf16.msra.mxu0 0
    %535 = vmatprep.subr.bf16.mxu0 0
    %536 = vmatpush1.bf16.msra.mxu0 0
    %537 = vmatprep.subr.bf16.mxu0 0
    %538 = vmatpush1.bf16.msra.mxu0 0
    %539 = vmatprep.mubr.bf16.mxu0 0
    %540 = vmatmul.mubr.bf16.gmra.mrb[0].mxu0 %v505
    %v541 = vpop.f32.mrb[0].mxu0
    %v542 = vadd.f32 0.0, %v541
    %v543 = vpop.f32.mrb[0].mxu0
    %v544 = vpop.f32.mrb[0].mxu0
    %v545 = vpop.f32.mrb[0].mxu0
    %546 = vdwg.mxu0
    %v547 = vadd.f32 %v502, %v542
    %v548 = vtanh.pop %v547
    %v549 = vld [vmem:[#allocation2 + $0x38] sm:$0xff]
    %v550 = vpack.c.bf16 %v548, %v548
    %v552 = vsel %vm158, %v550, 0
    %554 = vmatprep.subr.bf16.mxu0 0
    %555 = vmatpush1.bf16.msra.mxu0 %v206
    %556 = vmatprep.subr.bf16.mxu0 0
    %557 = vmatpush1.bf16.msra.mxu0 %v207
    %558 = vmatprep.subr.bf16.mxu0 0
    %559 = vmatpush1.bf16.msra.mxu0 %v208
    %560 = vmatprep.subr.bf16.mxu0 0
    %561 = vmatpush1.bf16.msra.mxu0 %v209
    %562 = vmatprep.subr.bf16.mxu0 0
    %563 = vmatpush1.bf16.msra.mxu0 %v210
    %564 = vmatprep.subr.bf16.mxu0 0
    %565 = vmatpush1.bf16.msra.mxu0 %v211
    %566 = vmatprep.subr.bf16.mxu0 0
    %567 = vmatpush1.bf16.msra.mxu0 0
    %568 = vmatprep.subr.bf16.mxu0 0
    %569 = vmatpush1.bf16.msra.mxu0 0
    %570 = vmatprep.subr.bf16.mxu0 0
    %571 = vmatpush1.bf16.msra.mxu0 0
    %572 = vmatprep.subr.bf16.mxu0 0
    %573 = vmatpush1.bf16.msra.mxu0 0
    %574 = vmatprep.subr.bf16.mxu0 0
    %575 = vmatpush1.bf16.msra.mxu0 0
    %576 = vmatprep.subr.bf16.mxu0 0
    %577 = vmatpush1.bf16.msra.mxu0 0
    %578 = vmatprep.subr.bf16.mxu0 0
    %579 = vmatpush1.bf16.msra.mxu0 0
    %580 = vmatprep.subr.bf16.mxu0 0
    %581 = vmatpush1.bf16.msra.mxu0 0
    %582 = vmatprep.subr.bf16.mxu0 0
    %583 = vmatpush1.bf16.msra.mxu0 0
    %584 = vmatprep.subr.bf16.mxu0 0
    %585 = vmatpush1.bf16.msra.mxu0 0
    %586 = vmatprep.mubr.bf16.mxu0 0
    %587 = vmatmul.mubr.bf16.gmra.mrb[0].mxu0 %v552
    %v588 = vpop.f32.mrb[0].mxu0
    %v589 = vadd.f32 0.0, %v588
    %v590 = vpop.f32.mrb[0].mxu0
    %v591 = vpop.f32.mrb[0].mxu0
    %v592 = vpop.f32.mrb[0].mxu0
    %593 = vdwg.mxu0
    %v594 = vadd.f32 %v549, %v589
    %v595 = vtanh.pop %v594
    %v596 = vpack.c.bf16 %v595, %v595
    %v598 = vsel %vm158, %v596, 0
    %600 = vmatprep.subr.bf16.mxu0 0
    %601 = vmatpush1.bf16.msra.mxu0 %v206
    %602 = vmatprep.subr.bf16.mxu0 0
    %603 = vmatpush1.bf16.msra.mxu0 %v207
    %604 = vmatprep.subr.bf16.mxu0 0
    %605 = vmatpush1.bf16.msra.mxu0 %v208
    %606 = vmatprep.subr.bf16.mxu0 0
    %607 = vmatpush1.bf16.msra.mxu0 %v209
    %608 = vmatprep.subr.bf16.mxu0 0
    %609 = vmatpush1.bf16.msra.mxu0 %v210
    %610 = vmatprep.subr.bf16.mxu0 0
    %611 = vmatpush1.bf16.msra.mxu0 %v211
    %612 = vmatprep.subr.bf16.mxu0 0
    %613 = vmatpush1.bf16.msra.mxu0 0
    %614 = vmatprep.subr.bf16.mxu0 0
    %615 = vmatpush1.bf16.msra.mxu0 0
    %616 = vmatprep.subr.bf16.mxu0 0
    %617 = vmatpush1.bf16.msra.mxu0 0
    %618 = vmatprep.subr.bf16.mxu0 0
    %619 = vmatpush1.bf16.msra.mxu0 0
    %620 = vmatprep.subr.bf16.mxu0 0
    %621 = vmatpush1.bf16.msra.mxu0 0
    %622 = vmatprep.subr.bf16.mxu0 0
    %623 = vmatpush1.bf16.msra.mxu0 0
    %624 = vmatprep.subr.bf16.mxu0 0
    %625 = vmatpush1.bf16.msra.mxu0 0
    %626 = vmatprep.subr.bf16.mxu0 0
    %627 = vmatpush1.bf16.msra.mxu0 0
    %628 = vmatprep.subr.bf16.mxu0 0
    %629 = vmatpush1.bf16.msra.mxu0 0
    %630 = vmatprep.subr.bf16.mxu0 0
    %631 = vmatpush1.bf16.msra.mxu0 0
    %632 = vmatprep.mubr.bf16.mxu0 0
    %633 = vmatmul.mubr.bf16.gmra.mrb[0].mxu0 %v598
    %v634 = vpop.f32.mrb[0].mxu0
    %v635 = vadd.f32 0.0, %v634
    %v636 = vpop.f32.mrb[0].mxu0
    %v637 = vpop.f32.mrb[0].mxu0
    %v638 = vpop.f32.mrb[0].mxu0
    %639 = vdwg.mxu0
    %v640 = vadd.f32 %v549, %v635
    %v641 = vtanh.pop %v640
    %v642 = vpack.c.bf16 %v641, %v641
    %v644 = vsel %vm158, %v642, 0
    %646 = vmatprep.subr.bf16.mxu0 0
    %647 = vmatpush1.bf16.msra.mxu0 %v206
    %648 = vmatprep.subr.bf16.mxu0 0
    %649 = vmatpush1.bf16.msra.mxu0 %v207
    %650 = vmatprep.subr.bf16.mxu0 0
    %651 = vmatpush1.bf16.msra.mxu0 %v208
    %652 = vmatprep.subr.bf16.mxu0 0
    %653 = vmatpush1.bf16.msra.mxu0 %v209
    %654 = vmatprep.subr.bf16.mxu0 0
    %655 = vmatpush1.bf16.msra.mxu0 %v210
    %656 = vmatprep.subr.bf16.mxu0 0
    %657 = vmatpush1.bf16.msra.mxu0 %v211
    %658 = vmatprep.subr.bf16.mxu0 0
    %659 = vmatpush1.bf16.msra.mxu0 0
    %660 = vmatprep.subr.bf16.mxu0 0
    %661 = vmatpush1.bf16.msra.mxu0 0
    %662 = vmatprep.subr.bf16.mxu0 0
    %663 = vmatpush1.bf16.msra.mxu0 0
    %664 = vmatprep.subr.bf16.mxu0 0
    %665 = vmatpush1.bf16.msra.mxu0 0
    %666 = vmatprep.subr.bf16.mxu0 0
    %667 = vmatpush1.bf16.msra.mxu0 0
    %668 = vmatprep.subr.bf16.mxu0 0
    %669 = vmatpush1.bf16.msra.mxu0 0
    %670 = vmatprep.subr.bf16.mxu0 0
    %671 = vmatpush1.bf16.msra.mxu0 0
    %672 = vmatprep.subr.bf16.mxu0 0
    %673 = vmatpush1.bf16.msra.mxu0 0
    %674 = vmatprep.subr.bf16.mxu0 0
    %675 = vmatpush1.bf16.msra.mxu0 0
    %676 = vmatprep.subr.bf16.mxu0 0
    %677 = vmatpush1.bf16.msra.mxu0 0
    %678 = vmatprep.mubr.bf16.mxu0 0
    %679 = vmatmul.mubr.bf16.gmra.mrb[0].mxu0 %v644
    %v680 = vpop.f32.mrb[0].mxu0
    %v681 = vadd.f32 0.0, %v680
    %v682 = vpop.f32.mrb[0].mxu0
    %v683 = vpop.f32.mrb[0].mxu0
    %v684 = vpop.f32.mrb[0].mxu0
    %685 = vdwg.mxu0
    %v686 = vadd.f32 %v549, %v681
    %v687 = vtanh.pop %v686
    %v688 = vld [vmem:[%s4] sm:$0x1]
    %v690 = vlaneseq
    %v691 = vshrl.u32 %v690, 7
    %v692 = vsub.s32 0, %v691
    %v693 = vrot.slane %v688, %v692
    %v695 = vmul.f32 %v687, %v693
    %v696 = vsel %vm158, %v695, 0.0
    %697 = vadd.xlane.f32.xlu0 %v696
    %v698 = vpop.xlane.xlu0 %697
    %v699 = vld [vmem:[#allocation3] sm:$0x1]
    %v701 = vlaneseq
    %v702 = vshrl.u32 %v701, 7
    %v703 = vsub.s32 0, %v702
    %v704 = vrot.slane %v699, %v703
    %v706 = vadd.f32 %v698, %v704
    %vm707 = vcmask 7168
    %708 = vst.msk [vmem:[%s6] sm:$0xff] %vm707, %v706
    // Predicated region
    $region30: #{tpu_custom_call.1} parent=1 // pred_check
      _
    $region31: #{tpu_custom_call.1} parent=1 // pred_check_branch
      %710 = sbr.rel (0) target = $region33
    $region32: #{tpu_custom_call.1} parent=1 // pred_region
      _
    $region33: #{tpu_custom_call.1} parent=1 // pred_fallthru
      _
    // Predicated region
    $region34: #{tpu_custom_call.1} parent=1 // pred_check
      _
    $region35: #{tpu_custom_call.1} parent=1 // pred_check_branch
      %712 = sbr.rel (0) target = $region37
    $region36: #{tpu_custom_call.1} parent=1 // pred_region
      _
    $region37: #{tpu_custom_call.1} parent=1 // pred_fallthru
      _
    %713 = vsyncpa [#allocation5], 1

</llo_original>
